<compile_context>
chip_gen: v7x
topology: tpu7x:2x2x1
jax: 0.10.0
libtpu: 0.0.40
codegen_flags: <defaults>
</compile_context>

<pallas_src>
import functools

import jax
import jax.numpy as jnp
from jax.experimental import pallas as pl
from jax.experimental.pallas import tpu as pltpu

_NEG_BIG = -1e30  # finite "-inf": avoids inf - inf -> nan in the online update


def _round_up(x, m):
    return ((x + m - 1) // m) * m


def _vmem_capacity_bytes():
    try:
        return int(pltpu.get_tpu_info().vmem_capacity_bytes)
    except Exception:
        return 64 * 1024 * 1024  # conservative fallback (v7x per-TC VMEM)


def _generator_kernel(x_ref, w_ref, b_ref, o_ref, m_scr, l_scr, *, tile_v):
    # x_ref: (tile_m, d_model)      w_ref: (d_model, tile_v)
    # b_ref: (1, tile_v) f32        o_ref: (tile_m, V_pad)  (VMEM-resident)
    # m_scr/l_scr: (tile_m, 1) f32 running max / running sum-exp
    j = pl.program_id(1)

    @pl.when(j == 0)
    def _init():
        m_scr[...] = jnp.full_like(m_scr, _NEG_BIG)
        l_scr[...] = jnp.zeros_like(l_scr)

    # MXU matmul (bf16 inputs, f32 accumulation), bias add in f32.
    logits = jnp.dot(x_ref[...], w_ref[...],
                     preferred_element_type=jnp.float32) + b_ref[...]

    # Online logsumexp update.
    m_prev = m_scr[...]
    m_new = jnp.maximum(m_prev, jnp.max(logits, axis=-1, keepdims=True))
    l_scr[...] = (l_scr[...] * jnp.exp(m_prev - m_new)
                  + jnp.sum(jnp.exp(logits - m_new), axis=-1, keepdims=True))
    m_scr[...] = m_new

    # Single aligned dynamic store of this vocab tile's raw logits into the
    # resident output panel (offset is a static multiple of tile_v, so this
    # lowers to an unmasked lane-dense vst with O(1) kernel code size).
    col = pl.multiple_of(j * tile_v, tile_v)
    o_ref[:, pl.ds(col, tile_v)] = logits.astype(o_ref.dtype)

    # Last vocab tile for this M tile: normalize the whole resident panel.
    @pl.when(j == pl.num_programs(1) - 1)
    def _finalize():
        lse = m_scr[...] + jnp.log(l_scr[...])
        o_ref[...] = (o_ref[...].astype(jnp.float32) - lse).astype(o_ref.dtype)


@functools.partial(
    jax.jit, static_argnames=("tile_m", "tile_v", "use_bf16", "out_dtype"))
def generator_forward(x, w_t, b, *, tile_m=256, tile_v=1024, use_bf16=True,
                      out_dtype=jnp.float32):
    """x: (batch, seq, d_model); w_t: (d_model, vocab); b: (vocab,)"""
    batch, seq, d_model = x.shape
    vocab = w_t.shape[1]
    M = batch * seq

    in_dtype = jnp.bfloat16 if use_bf16 else jnp.float32
    in_isz = jnp.dtype(in_dtype).itemsize
    out_isz = jnp.dtype(out_dtype).itemsize

    # ---- vocab tile (lane axis): multiple of 128, clamped to padded vocab ----
    tile_v = _round_up(min(tile_v, _round_up(vocab, 128)), 128)
    V_pad = _round_up(vocab, tile_v)
    num_v = V_pad // tile_v

    # ---- VMEM-aware M tile: as large as possible (weight stream is re-read
    #      M/tile_m times, so AI vs W == tile_m flop/byte) while the resident
    #      (tile_m, V_pad) panel + double-buffered inputs fit in ~75% of this
    #      generation's per-core VMEM (v7x is only 64 MiB). ----
    vmem_cap = _vmem_capacity_bytes()
    budget = int(vmem_cap * 0.75)

    def vmem_bytes(tm):
        x_b = tm * d_model * in_isz * 2            # double-buffered x tile
        w_b = d_model * tile_v * in_isz * 2        # double-buffered W panel
        b_b = 8 * tile_v * 4 * 2                   # bias tile (sublane-padded)
        o_b = tm * V_pad * out_isz * 2             # resident output panel
        scr = tm * 4 * 2 * 2                       # m / l scratch
        return x_b + w_b + b_b + o_b + scr

    tile_m = _round_up(min(tile_m, _round_up(M, 8)), 8)
    while tile_m > 8 and vmem_bytes(tile_m) > budget:
        tile_m = max(8, _round_up(tile_m // 2, 8))

    M_pad = _round_up(M, tile_m)
    num_m = M_pad // tile_m

    # VMEM limit from the actual buffer sum + headroom, capped below physical.
    vmem_limit = int(min(0.9 * vmem_cap,
                         max(vmem_bytes(tile_m) + 4 * 1024 * 1024,
                             16 * 1024 * 1024)))

    # ---- padding (padded vocab columns get a -1e30 bias; padded rows are
    #      discarded after the call) ----
    x2 = x.reshape(M, d_model)
    if M_pad != M:
        x2 = jnp.pad(x2, ((0, M_pad - M), (0, 0)))
    w_p, b_p = w_t, b
    if V_pad != vocab:
        w_p = jnp.pad(w_t, ((0, 0), (0, V_pad - vocab)))
        b_p = jnp.pad(b, (0, V_pad - vocab), constant_values=_NEG_BIG)

    x_in = x2.astype(in_dtype)
    w_in = w_p.astype(in_dtype)
    b2 = b_p.reshape(1, V_pad).astype(jnp.float32)

    cost = pl.CostEstimate(
        flops=2 * M_pad * d_model * V_pad,
        transcendentals=M_pad * V_pad,
        bytes_accessed=(x_in.size * in_isz
                        + num_m * (w_in.size * in_isz + b2.size * 4)
                        + M_pad * V_pad * out_isz),
    )

    kernel = functools.partial(_generator_kernel, tile_v=tile_v)

    out = pl.pallas_call(
        kernel,
        out_shape=jax.ShapeDtypeStruct((M_pad, V_pad), out_dtype),
        grid_spec=pltpu.PrefetchScalarGridSpec(
            num_scalar_prefetch=0,
            grid=(num_m, num_v),
            in_specs=[
                pl.BlockSpec((tile_m, d_model), lambda i, j: (i, 0)),
                pl.BlockSpec((d_model, tile_v), lambda i, j: (0, j)),
                pl.BlockSpec((1, tile_v), lambda i, j: (0, j)),
            ],
            # output block is resident across the vocab (streamed) axis
            out_specs=pl.BlockSpec((tile_m, V_pad), lambda i, j: (i, 0)),
            scratch_shapes=[
                pltpu.VMEM((tile_m, 1), jnp.float32),  # running max
                pltpu.VMEM((tile_m, 1), jnp.float32),  # running sum-exp
            ],
        ),
        compiler_params=pltpu.CompilerParams(
            dimension_semantics=("parallel", "arbitrary"),
            vmem_limit_bytes=vmem_limit,
        ),
        cost_estimate=cost,
    )(x_in, w_in, b2)

    out = out[:M, :vocab]
    return out.reshape(batch, seq, vocab)


if __name__ == "__main__":
    def run_case(batch, seq, d_model, vocab, tile_m, tile_v,
                 out_dtype=jnp.float32, tol=2e-3):
        key = jax.random.PRNGKey(0)
        kx, kw, kb = jax.random.split(key, 3)
        x = jax.random.normal(kx, (batch, seq, d_model), dtype=jnp.float32)
        # deterministic init mimicking nn.Linear(d_model, vocab_size)
        bound = 1.0 / (d_model ** 0.5)
        w = jax.random.uniform(kw, (vocab, d_model), jnp.float32, -bound, bound)
        b = jax.random.uniform(kb, (vocab,), jnp.float32, -bound, bound)

        y = generator_forward(x, w.T, b, tile_m=tile_m, tile_v=tile_v,
                              out_dtype=out_dtype)
        jax.block_until_ready(y)

        # reference uses the same bf16 quantization of the matmul inputs
        xb = x.astype(jnp.bfloat16).astype(jnp.float32)
        wb = w.astype(jnp.bfloat16).astype(jnp.float32)
        ref = jax.nn.log_softmax(xb @ wb.T + b, axis=-1)

        assert y.shape == (batch, seq, vocab)
        err = float(jnp.max(jnp.abs(y.astype(jnp.float32) - ref)))
        assert err < tol, err

    # small case consistent with the module's forward (single M / V tile)
    run_case(batch=2, seq=8, d_model=32, vocab=128, tile_m=256, tile_v=1024)
    # exercises the 2-D grid: multiple M tiles, multiple V tiles, row/vocab pad
    run_case(batch=2, seq=5, d_model=32, vocab=384, tile_m=8, tile_v=128)
    # bf16 output panel (halved resident VMEM + HBM writeback), looser tol
    run_case(batch=2, seq=8, d_model=32, vocab=384, tile_m=256, tile_v=256,
             out_dtype=jnp.bfloat16, tol=1e-1)

    print("KERNEL_OK")
</pallas_src>

<mosaic_0001>
module attributes {stable_mosaic.version = 11 : i64} {
  func.func @_generator_kernel(%arg0: i32, %arg1: i32, %arg2: memref<16x32xbf16, #tpu.memory_space<vmem>>, %arg3: memref<32x128xbf16, #tpu.memory_space<vmem>>, %arg4: memref<1x128xf32, #tpu.memory_space<vmem>>, %arg5: memref<16x128xf32, #tpu.memory_space<vmem>>, %arg6: memref<16x1xf32, #tpu.memory_space<vmem>>, %arg7: memref<16x1xf32, #tpu.memory_space<vmem>>) attributes {dimension_semantics = [#tpu.dimension_semantics<parallel>, #tpu.dimension_semantics<arbitrary>], iteration_bounds = array<i64: 1, 1>, scalar_prefetch = 0 : i64, scratch_operands = 2 : i64, tpu.core_type = #tpu.core_type<tc>, window_params = [{transform_indices = @transform_0, window_bounds = array<i64: 16, 32>}, {transform_indices = @transform_1, window_bounds = array<i64: 32, 128>}, {transform_indices = @transform_2, window_bounds = array<i64: 1, 128>}, {transform_indices = @transform_3, window_bounds = array<i64: 16, 128>}]} {
    %c0_i32 = arith.constant 0 : i32
    %0 = arith.cmpi eq, %arg1, %c0_i32 : i32
    %1 = arith.extui %0 : i1 to i32
    %c0_i32_0 = arith.constant 0 : i32
    %2 = arith.cmpi ne, %1, %c0_i32_0 : i32
    scf.if %2 {
      %cst_19 = arith.constant -1.000000e+30 : f32
      %32 = vector.broadcast %cst_19 : f32 to vector<16x1xf32>
      %c0_20 = arith.constant 0 : index
      %c0_21 = arith.constant 0 : index
      %33 = vector.load %arg6[%c0_20, %c0_21] : memref<16x1xf32, #tpu.memory_space<vmem>>, vector<16x1xf32>
      tpu.vector_store %arg6[%c0_20, %c0_21], %32 {strides = array<i32>} : memref<16x1xf32, #tpu.memory_space<vmem>>, vector<16x1xf32>,
      %cst_22 = arith.constant 0.000000e+00 : f32
      %34 = vector.broadcast %cst_22 : f32 to vector<16x1xf32>
      %c0_23 = arith.constant 0 : index
      %c0_24 = arith.constant 0 : index
      %35 = vector.load %arg7[%c0_23, %c0_24] : memref<16x1xf32, #tpu.memory_space<vmem>>, vector<16x1xf32>
      tpu.vector_store %arg7[%c0_23, %c0_24], %34 {strides = array<i32>} : memref<16x1xf32, #tpu.memory_space<vmem>>, vector<16x1xf32>,
    } else {
    }
    %c0 = arith.constant 0 : index
    %c0_1 = arith.constant 0 : index
    %3 = vector.load %arg2[%c0, %c0_1] : memref<16x32xbf16, #tpu.memory_space<vmem>>, vector<16x32xbf16>
    %c0_2 = arith.constant 0 : index
    %c0_3 = arith.constant 0 : index
    %4 = vector.load %arg3[%c0_2, %c0_3] : memref<32x128xbf16, #tpu.memory_space<vmem>>, vector<32x128xbf16>
    %cst = arith.constant dense<0.000000e+00> : vector<16x128xf32>
    %5 = tpu.matmul %3, %4, %cst {dimension_numbers = #tpu.dot_dimension_numbers<[1], [0], [0], [1], [0, 0, 1, 1], [], []>} : vector<16x32xbf16>, vector<32x128xbf16>, vector<16x128xf32> -> vector<16x128xf32>
    %c0_4 = arith.constant 0 : index
    %c0_5 = arith.constant 0 : index
    %6 = vector.load %arg4[%c0_4, %c0_5] : memref<1x128xf32, #tpu.memory_space<vmem>>, vector<1x128xf32>
    %7 = vector.broadcast %6 : vector<1x128xf32> to vector<16x128xf32>
    %8 = arith.addf %5, %7 : vector<16x128xf32>
    %c0_6 = arith.constant 0 : index
    %c0_7 = arith.constant 0 : index
    %9 = vector.load %arg6[%c0_6, %c0_7] : memref<16x1xf32, #tpu.memory_space<vmem>>, vector<16x1xf32>
    %cst_8 = arith.constant dense<0xFF800000> : vector<16xf32>
    %10 = vector.multi_reduction <maximumf>, %8, %cst_8 [1] : vector<16x128xf32> to vector<16xf32>
    %11 = vector.shape_cast %10 : vector<16xf32> to vector<16x1xf32>
    %12 = arith.maximumf %9, %11 : vector<16x1xf32>
    %c0_9 = arith.constant 0 : index
    %c0_10 = arith.constant 0 : index
    %13 = vector.load %arg7[%c0_9, %c0_10] : memref<16x1xf32, #tpu.memory_space<vmem>>, vector<16x1xf32>
    %14 = arith.subf %9, %12 : vector<16x1xf32>
    %15 = math.exp %14 : vector<16x1xf32>
    %16 = arith.mulf %13, %15 : vector<16x1xf32>
    %17 = vector.broadcast %12 : vector<16x1xf32> to vector<16x128xf32>
    %18 = arith.subf %8, %17 : vector<16x128xf32>
    %19 = math.exp %18 : vector<16x128xf32>
    %cst_11 = arith.constant dense<0.000000e+00> : vector<16xf32>
    %20 = vector.multi_reduction <add>, %19, %cst_11 [1] : vector<16x128xf32> to vector<16xf32>
    %21 = vector.shape_cast %20 : vector<16xf32> to vector<16x1xf32>
    %22 = arith.addf %16, %21 : vector<16x1xf32>
    %c0_12 = arith.constant 0 : index
    %c0_13 = arith.constant 0 : index
    %23 = vector.load %arg7[%c0_12, %c0_13] : memref<16x1xf32, #tpu.memory_space<vmem>>, vector<16x1xf32>
    tpu.vector_store %arg7[%c0_12, %c0_13], %22 {strides = array<i32>} : memref<16x1xf32, #tpu.memory_space<vmem>>, vector<16x1xf32>,
    %c0_14 = arith.constant 0 : index
    %c0_15 = arith.constant 0 : index
    %24 = vector.load %arg6[%c0_14, %c0_15] : memref<16x1xf32, #tpu.memory_space<vmem>>, vector<16x1xf32>
    tpu.vector_store %arg6[%c0_14, %c0_15], %12 {strides = array<i32>} : memref<16x1xf32, #tpu.memory_space<vmem>>, vector<16x1xf32>,
    %c128_i32 = arith.constant 128 : i32
    %25 = arith.muli %arg1, %c128_i32 : i32
    %26 = tpu.assume_multiple %25, 128 : i32
    %c0_16 = arith.constant 0 : index
    %27 = arith.index_cast %26 : i32 to index
    %28 = vector.load %arg5[%c0_16, %27] : memref<16x128xf32, #tpu.memory_space<vmem>>, vector<16x128xf32>
    tpu.vector_store %arg5[%c0_16, %27], %8 {strides = array<i32>} : memref<16x128xf32, #tpu.memory_space<vmem>>, vector<16x128xf32>,
    %c0_i32_17 = arith.constant 0 : i32
    %29 = arith.cmpi eq, %arg1, %c0_i32_17 : i32
    %30 = arith.extui %29 : i1 to i32
    %c0_i32_18 = arith.constant 0 : i32
    %31 = arith.cmpi ne, %30, %c0_i32_18 : i32
    scf.if %31 {
      %c0_19 = arith.constant 0 : index
      %c0_20 = arith.constant 0 : index
      %32 = vector.load %arg6[%c0_19, %c0_20] : memref<16x1xf32, #tpu.memory_space<vmem>>, vector<16x1xf32>
      %c0_21 = arith.constant 0 : index
      %c0_22 = arith.constant 0 : index
      %33 = vector.load %arg7[%c0_21, %c0_22] : memref<16x1xf32, #tpu.memory_space<vmem>>, vector<16x1xf32>
      %34 = math.log %33 : vector<16x1xf32>
      %35 = arith.addf %32, %34 : vector<16x1xf32>
      %c0_23 = arith.constant 0 : index
      %c0_24 = arith.constant 0 : index
      %36 = vector.load %arg5[%c0_23, %c0_24] : memref<16x128xf32, #tpu.memory_space<vmem>>, vector<16x128xf32>
      %37 = vector.broadcast %35 : vector<16x1xf32> to vector<16x128xf32>
      %38 = arith.subf %36, %37 : vector<16x128xf32>
      %c0_25 = arith.constant 0 : index
      %c0_26 = arith.constant 0 : index
      %39 = vector.load %arg5[%c0_25, %c0_26] : memref<16x128xf32, #tpu.memory_space<vmem>>, vector<16x128xf32>
      tpu.vector_store %arg5[%c0_25, %c0_26], %38 {strides = array<i32>} : memref<16x128xf32, #tpu.memory_space<vmem>>, vector<16x128xf32>,
    } else {
    }
    return
  }
  func.func @transform_0(%arg0: i32, %arg1: i32) -> (i32, i32) {
    %c0_i32 = arith.constant 0 : i32
    %c0_i32_0 = arith.constant 0 : i32
    return %arg0, %c0_i32 : i32, i32
  }
  func.func @transform_1(%arg0: i32, %arg1: i32) -> (i32, i32) {
    %c0_i32 = arith.constant 0 : i32
    %c0_i32_0 = arith.constant 0 : i32
    return %c0_i32, %arg1 : i32, i32
  }
  func.func @transform_2(%arg0: i32, %arg1: i32) -> (i32, i32) {
    %c0_i32 = arith.constant 0 : i32
    %c0_i32_0 = arith.constant 0 : i32
    return %c0_i32, %arg1 : i32, i32
  }
  func.func @transform_3(%arg0: i32, %arg1: i32) -> (i32, i32) {
    %c0_i32 = arith.constant 0 : i32
    %c0_i32_0 = arith.constant 0 : i32
    return %arg0, %c0_i32 : i32, i32
  }
}

</mosaic_0001>

<llo_original>
// kernel: generator_forward.1
$region0: #{generator_forward.1}
  #allocation0 [shape = 'u32[]', space=smem, size = 0x4, offset = 0x4, fixed_abs, tag = 'smem constant byte address 0x4 - core index']
  #allocation1 [shape = 'u32[144,128]{1,0:T(1,128)}', space=vmem, size = 0x12000, scoped, tag = 'internal scratch']
  #allocation2 [shape = 'f32[16,1]{1,0:T(8,128)}', space=vmem, size = 0x2000, scoped, tag = 'scratch operand']
  #allocation3 [shape = 'f32[16,1]{1,0:T(8,128)}', space=vmem, size = 0x2000, scoped, tag = 'scratch operand']
  %s0 = inlined_call_operand.vmem [shape: bf16[16,32], index: 0, kind: input, shape index: {}]
  %s1 = inlined_call_operand.vmem [shape: bf16[32,128], index: 1, kind: input, shape index: {}]
  %s2 = inlined_call_operand.vmem [shape: f32[1,128], index: 2, kind: input, shape index: {}]
  %s3 = inlined_call_operand.hbm [shape: f32[16,128], index: 3, kind: output, shape index: {}]
  %s4 = sld [smem:[#allocation0]]
  $region30: #{generator_forward.1} parent=0
    _
  %s6 = ssub.s32 1, %s4
  %s7 = scalar_select 0, %s6, %s4
  $region1: #{generator_forward.1} parent=0
    #allocation4 [shape = 'u8[8192]{0}', space=vmem, size = 0x2000, scoped, tag = 'output window, operand 0, single buffered']
    #allocation5 [shape = 's32[1]{0}', space=sflag, size = 0x4, scoped, tag = 'scoped memory for generator_forward.1']
    %8 = vsyncpa [#allocation5], 0
    // Predicated region
    $region2: #{generator_forward.1} parent=1 // pred_check
      _
    $region3: #{generator_forward.1} parent=1 // pred_check_branch
      %10 = sbr.rel (0) target = $region5
    $region4: #{generator_forward.1} parent=1 // pred_region
      _
    $region5: #{generator_forward.1} parent=1 // pred_fallthru
      _
    // Predicated region
    $region6: #{generator_forward.1} parent=1 // pred_check
      _
    $region7: #{generator_forward.1} parent=1 // pred_check_branch
      %12 = sbr.rel (0) target = $region9
    $region8: #{generator_forward.1} parent=1 // pred_region
      _
    $region9: #{generator_forward.1} parent=1 // pred_fallthru
      _
    // Predicated region
    $region10: #{generator_forward.1} parent=1 // pred_check
      _
    $region11: #{generator_forward.1} parent=1 // pred_check_branch
      %14 = sbr.rel (0) target = $region13
    $region12: #{generator_forward.1} parent=1 // pred_region
      _
    $region13: #{generator_forward.1} parent=1 // pred_fallthru
      _
    %p16 = scmp.eq.s32.totalorder 0, 0
    // Predicated region
    $region14: #{generator_forward.1} parent=1 // pred_check
      %p17 = pneg %p16
    $region15: #{generator_forward.1} parent=1 // pred_check_branch
      %19 = sbr.rel (%p17) target = $region17
    $region16: #{generator_forward.1} parent=1 // pred_region
      %vm20 = vcmask 7168
      %21 = vst.msk [vmem:[#allocation2] sm:$0xff] %vm20, -1e+30
      %22 = vst.msk [vmem:[#allocation2 + $0x8] sm:$0xff] %vm20, -1e+30
      %23 = vst.msk [vmem:[#allocation3] sm:$0xff] %vm20, 0.0
      %24 = vst.msk [vmem:[#allocation3 + $0x8] sm:$0xff] %vm20, 0.0
    $region17: #{generator_forward.1} parent=1 // pred_fallthru
      _
    %v25 = vld [vmem:[%s0] sm:$0xf]
    %v26 = vld [vmem:[%s0 + $0x4] sm:$0xf]
    %v27 = vld [vmem:[%s1] sm:$0xf]
    %v28 = vld [vmem:[%s1 + $0x4] sm:$0xf]
    %v29 = vld [vmem:[%s1 + $0x8] sm:$0xf]
    %v30 = vld [vmem:[%s1 + $0xc] sm:$0xf]
    %v31 = vld [vmem:[%s2] sm:$0x1]
    %v33 = vlaneseq
    %v34 = vshrl.u32 %v33, 7
    %v35 = vsub.s32 0, %v34
    %v36 = vrot.slane %v31, %v35
    %v40 = vunpack.c.l.b16 %v25
    %v41 = vunpack.c.l.b16 %v26
    %v42 = vpack.c.b16 %v41, %v40
    %v47 = vunpack.c.l.b16 %v27
    %v48 = vunpack.c.l.b16 %v28
    %v49 = vunpack.c.l.b16 %v29
    %v50 = vunpack.c.l.b16 %v30
    %v51 = vpack.c.b16 %v48, %v47
    %v52 = vpack.c.b16 %v50, %v49
    %vm55 = vcmask 261120
    %v57 = vsel %vm55, %v42, 0
    %59 = vmatprep.subr.bf16.mxu0 0
    %60 = vmatpush1.bf16.msra.mxu0 %v51
    %61 = vmatprep.subr.bf16.mxu0 0
    %62 = vmatpush1.bf16.msra.mxu0 %v52
    %63 = vmatprep.subr.bf16.mxu0 0
    %64 = vmatpush1.bf16.msra.mxu0 0
    %65 = vmatprep.subr.bf16.mxu0 0
    %66 = vmatpush1.bf16.msra.mxu0 0
    %67 = vmatprep.subr.bf16.mxu0 0
    %68 = vmatpush1.bf16.msra.mxu0 0
    %69 = vmatprep.subr.bf16.mxu0 0
    %70 = vmatpush1.bf16.msra.mxu0 0
    %71 = vmatprep.subr.bf16.mxu0 0
    %72 = vmatpush1.bf16.msra.mxu0 0
    %73 = vmatprep.subr.bf16.mxu0 0
    %74 = vmatpush1.bf16.msra.mxu0 0
    %75 = vmatprep.subr.bf16.mxu0 0
    %76 = vmatpush1.bf16.msra.mxu0 0
    %77 = vmatprep.subr.bf16.mxu0 0
    %78 = vmatpush1.bf16.msra.mxu0 0
    %79 = vmatprep.subr.bf16.mxu0 0
    %80 = vmatpush1.bf16.msra.mxu0 0
    %81 = vmatprep.subr.bf16.mxu0 0
    %82 = vmatpush1.bf16.msra.mxu0 0
    %83 = vmatprep.subr.bf16.mxu0 0
    %84 = vmatpush1.bf16.msra.mxu0 0
    %85 = vmatprep.subr.bf16.mxu0 0
    %86 = vmatpush1.bf16.msra.mxu0 0
    %87 = vmatprep.subr.bf16.mxu0 0
    %88 = vmatpush1.bf16.msra.mxu0 0
    %89 = vmatprep.subr.bf16.mxu0 0
    %90 = vmatpush1.bf16.msra.mxu0 0
    %91 = vmatprep.mubr.bf16.mxu0 0
    %92 = vmatmul.mubr.bf16.gmra.mrb[0].mxu0 %v57
    %v93 = vpop.f32.mrb[0].mxu0
    %v94 = vadd.f32 %v36, %v93
    %v95 = vpop.f32.mrb[0].mxu0
    %v96 = vpop.f32.mrb[0].mxu0
    %v97 = vadd.f32 %v36, %v96
    %v98 = vpop.f32.mrb[0].mxu0
    %99 = vdwg.mxu0
    %v100 = vld [vmem:[#allocation2] sm:$0xff]
    %v101 = vld [vmem:[#allocation2 + $0x8] sm:$0xff]
    %102 = vmax.xlane.f32.xlu0 %v94
    %v103 = vpop.xlane.xlu0 %102
    %104 = vmax.xlane.f32.xlu0 %v97
    %v105 = vpop.xlane.xlu0 %104
    %v106 = vmax.f32 %v100, %v103
    %v107 = vmax.f32 %v101, %v105
    %v108 = vld [vmem:[#allocation3] sm:$0xff]
    %v109 = vld [vmem:[#allocation3 + $0x8] sm:$0xff]
    %v110 = vsub.f32 %v100, %v106
    %v111 = vsub.f32 %v101, %v107
    %v112 = vmul.f32 %v110, 1.442695
    %v113 = vpow.pop %v112
    %v114 = vmul.f32 %v111, 1.442695
    %v115 = vpow.pop %v114
    %v116 = vmul.f32 %v108, %v113
    %v117 = vmul.f32 %v109, %v115
    %119 = vset.pattern.permute.xlu0 0
    %120 = vperm.xlu0 %119, %v106
    %v121 = vpop.permute.xlu0 %120
    %124 = vset.pattern.permute.xlu0 0
    %125 = vperm.xlu0 %124, %v107
    %v126 = vpop.permute.xlu0 %125
    %v128 = vsub.f32 %v94, %v121
    %v129 = vsub.f32 %v97, %v126
    %v130 = vmul.f32 %v128, 1.442695
    %v131 = vpow.pop %v130
    %v132 = vmul.f32 %v129, 1.442695
    %v133 = vpow.pop %v132
    %134 = vadd.xlane.f32.xlu0 %v131
    %v135 = vpop.xlane.xlu0 %134
    %136 = vadd.xlane.f32.xlu0 %v133
    %v137 = vpop.xlane.xlu0 %136
    %v138 = vadd.f32 %v116, %v135
    %v139 = vadd.f32 %v117, %v137
    %vm140 = vcmask 7168
    %141 = vst.msk [vmem:[#allocation3] sm:$0xff] %vm140, %v138
    %142 = vst.msk [vmem:[#allocation3 + $0x8] sm:$0xff] %vm140, %v139
    %143 = vst.msk [vmem:[#allocation2] sm:$0xff] %vm140, %v106
    %144 = vst.msk [vmem:[#allocation2 + $0x8] sm:$0xff] %vm140, %v107
    %s145 = smul.u32 0, 128
    %s146 = sshra.s32 %s145, 7
    %s147 = sand.u32 %s145, 127
    %s148 = scalar_lea.vmem [#allocation4], %s146
    %149 = vst [vmem:[%s148] sm:$0xff] %v94
    %150 = vst [vmem:[%s148 + $0x8] sm:$0xff] %v97
    // Predicated region
    $region18: #{generator_forward.1} parent=1 // pred_check
      %p151 = pneg %p16
    $region19: #{generator_forward.1} parent=1 // pred_check_branch
      %153 = sbr.rel (%p151) target = $region21
    $region20: #{generator_forward.1} parent=1 // pred_region
      %v154 = vld [vmem:[#allocation2] sm:$0xff]
      %v155 = vld [vmem:[#allocation2 + $0x8] sm:$0xff]
      %v156 = vld [vmem:[#allocation3] sm:$0xff]
      %v157 = vld [vmem:[#allocation3 + $0x8] sm:$0xff]
      %v158 = vlog2.pop %v156
      %v159 = vmul.f32 %v158, 0.6931472
      %v160 = vlog2.pop %v157
      %v161 = vmul.f32 %v160, 0.6931472
      %v162 = vadd.f32 %v154, %v159
      %v163 = vadd.f32 %v155, %v161
      %v164 = vld [vmem:[#allocation4] sm:$0xff]
      %v165 = vld [vmem:[#allocation4 + $0x8] sm:$0xff]
      %167 = vset.pattern.permute.xlu0 0
      %168 = vperm.xlu0 %167, %v162
      %v169 = vpop.permute.xlu0 %168
      %172 = vset.pattern.permute.xlu0 0
      %173 = vperm.xlu0 %172, %v163
      %v174 = vpop.permute.xlu0 %173
      %v176 = vsub.f32 %v164, %v169
      %v177 = vsub.f32 %v165, %v174
      %178 = vst [vmem:[#allocation4] sm:$0xff] %v176
      %179 = vst [vmem:[#allocation4 + $0x8] sm:$0xff] %v177
    $region21: #{generator_forward.1} parent=1 // pred_fallthru
      _
    // Predicated region
    $region22: #{generator_forward.1} parent=1 // pred_check
      _
    $region23: #{generator_forward.1} parent=1 // pred_check_branch
      %181 = sbr.rel (0) target = $region25
    $region24: #{generator_forward.1} parent=1 // pred_region
      %s183 = ssub.s32 256, 256
      %184 = vsyncadd [#allocation5], %s183
      %s185 = sshll.u32 [#allocation4], 4
      %s186 = int_to_ptr.vmem [resolvable:$true] %s185
      %191 = dma.vmem_to_hbm [thread:$0]  %s186, 256, %s3, [#allocation5], 128, 128, 8
    $region25: #{generator_forward.1} parent=1 // pred_fallthru
      _
    // Predicated region
    $region26: #{generator_forward.1} parent=1 // pred_check
      _
    $region27: #{generator_forward.1} parent=1 // pred_check_branch
      %193 = sbr.rel (0) target = $region29
    $region28: #{generator_forward.1} parent=1 // pred_region
      %194 = dma.done [#allocation5], 256
    $region29: #{generator_forward.1} parent=1 // pred_fallthru
      _
    %195 = vsyncpa [#allocation5], 1

</llo_original>
